<compile_context>
chip_gen: v7x
topology: tpu7x:2x2x1
jax: 0.10.0
libtpu: 0.0.40
codegen_flags: <defaults>
</compile_context>

<pallas_src>
import jax
import jax.numpy as jnp
import numpy as np
from jax.experimental import pallas as pl
from jax.experimental.pallas import tpu as pltpu

C_IN = 4       # input channels
C_OUT = 10     # ensemble members / output channels
C_PAD = 16     # C_OUT padded to a multiple of 8 sublanes
K = 3          # conv kernel size (padding = 1)
KK_CIN = K * K * C_IN   # 36 contraction rows


def _conv_matmul_kernel(w_ref, b_ref, p_ref, o_ref):
    """One lane-chunk per grid step.

    w_ref : (C_PAD, 36)        im2col'd conv weights (tap-major columns)
    b_ref : (C_PAD, 1)         bias (broadcast over lanes)
    p_ref : (36, LT)           im2col patch chunk (lanes = n*H*W + y*W + x)
    o_ref : (C_PAD, LT)        lane-dense output chunk
    """
    acc = jnp.dot(w_ref[...], p_ref[...], preferred_element_type=jnp.float32)
    o_ref[...] = (acc + b_ref[...]).astype(o_ref.dtype)


def _images_per_step(n, hw):
    """Largest divisor of n such that the lane tile is ~<= 8192 lanes."""
    cap = max(1, 8192 // hw)
    best = 1
    for d in range(1, min(n, cap) + 1):
        if n % d == 0:
            best = d
    return best


def ensemble_entropy_detector_forward(x_nchw, weight, bias):
    """Pallas implementation of EnsembleEntropyDetector.forward.

    x_nchw : (N, C_in, H, W) float32   (PyTorch NCHW convention)
    weight : (C_out, C_in, 3, 3) float32
    bias   : (C_out,) float32
    returns: (N, C_out, H, W) float32  (net_out, NCHW)
    """
    N, cin, H, W = x_nchw.shape
    assert cin == C_IN
    hw = H * W
    total = N * hw

    # ---- wrapper-side glue (XLA): zero-pad + im2col patch precompute -------
    x_pad = jnp.pad(x_nchw, ((0, 0), (0, 0), (1, 1), (1, 1)))   # (N,C,H+2,W+2)

    # Patch row index = tap*C_in + c_in (tap-major, channel-minor), matching
    # the weight column order. Lane index = n*H*W + y*W + x (batch collapsed
    # into the lane dimension).
    taps = []
    for dy in range(K):
        for dx in range(K):
            t = x_pad[:, :, dy:dy + H, dx:dx + W]               # (N, C, H, W)
            taps.append(jnp.transpose(t, (1, 0, 2, 3)).reshape(cin, total))
    patch = jnp.concatenate(taps, axis=0)                        # (36, N*H*W)

    # (C_out, C_in, ky, kx) -> (C_out, ky, kx, C_in) -> (C_out, 36), then pad
    # the output-channel dim to 16 sublanes (extra rows are zero weight/bias).
    w_im2col = jnp.transpose(weight, (0, 2, 3, 1)).reshape(C_OUT, KK_CIN)
    w_pad = jnp.zeros((C_PAD, KK_CIN), jnp.float32).at[:C_OUT].set(w_im2col)
    b_pad = jnp.zeros((C_PAD, 1), jnp.float32).at[:C_OUT, 0].set(bias)

    # ---- lane tiling: whole batch in one step at small sizes ---------------
    ips = _images_per_step(N, hw)
    lane_tile = ips * hw                     # multiple of H*W (and of 128 here)
    grid = (total // lane_tile,)

    out_flat = pl.pallas_call(
        _conv_matmul_kernel,
        out_shape=jax.ShapeDtypeStruct((C_PAD, total), jnp.float32),
        grid=grid,
        in_specs=[
            pl.BlockSpec((C_PAD, KK_CIN), lambda j: (0, 0)),
            pl.BlockSpec((C_PAD, 1), lambda j: (0, 0)),
            pl.BlockSpec((KK_CIN, lane_tile), lambda j: (0, j)),
        ],
        out_specs=pl.BlockSpec((C_PAD, lane_tile), lambda j: (0, j)),
        # Keep everything on one TC at this size (per v7x feedback); the lane
        # chunks are independent, but per-step work is far below the point
        # where megacore sharding pays off.
        compiler_params=pltpu.CompilerParams(
            dimension_semantics=("arbitrary",)),
    )(w_pad, b_pad, patch)

    # (C_PAD, N*H*W) -> (N, C_out, H, W): drop the padded channels, restore NCHW.
    out = out_flat.reshape(C_PAD, N, H, W)[:C_OUT]
    return jnp.transpose(out, (1, 0, 2, 3))


def _reference_forward(x_nchw, weight, bias):
    """Pure-JAX reference (same semantics as torch Conv2d, pad=1, stride=1)."""
    out = jax.lax.conv_general_dilated(
        x_nchw, weight,
        window_strides=(1, 1), padding=((1, 1), (1, 1)),
        dimension_numbers=("NCHW", "OIHW", "NCHW"),
    )
    return out + bias.reshape(1, C_OUT, 1, 1)


# TODO(synk): testset_ood_detection / testset_correlation (AUROC,
# SpearmanCorrCoef, UMapGenerator, DataLoader iteration) are evaluation-time
# host glue, not part of forward(); they are not translated to Pallas.

if __name__ == "__main__":
    key = jax.random.PRNGKey(0)
    kx, kw, kb = jax.random.split(key, 3)

    # SMALL deterministic shapes: batch=2, channels=4, spatial=16x16.
    x = jax.random.normal(kx, (2, C_IN, 16, 16), dtype=jnp.float32)
    fan_in = C_IN * K * K
    weight = jax.random.normal(kw, (C_OUT, C_IN, K, K), dtype=jnp.float32) / np.sqrt(fan_in)
    bias = jax.random.normal(kb, (C_OUT,), dtype=jnp.float32) * 0.01

    net_out = ensemble_entropy_detector_forward(x, weight, bias)
    net_out = jax.block_until_ready(net_out)

    ref = jax.block_until_ready(_reference_forward(x, weight, bias))
    assert net_out.shape == (2, C_OUT, 16, 16)
    np.testing.assert_allclose(np.asarray(net_out), np.asarray(ref),
                               rtol=1e-5, atol=1e-5)

    print("KERNEL_OK")
</pallas_src>

<mosaic_0001>
module attributes {stable_mosaic.version = 11 : i64} {
  func.func @_conv_matmul_kernel(%arg0: i32, %arg1: memref<16x36xf32, #tpu.memory_space<vmem>>, %arg2: memref<16x1xf32, #tpu.memory_space<vmem>>, %arg3: memref<36x512xf32, #tpu.memory_space<vmem>>, %arg4: memref<16x512xf32, #tpu.memory_space<vmem>>) attributes {dimension_semantics = [#tpu.dimension_semantics<arbitrary>], iteration_bounds = array<i64: 1>, scalar_prefetch = 0 : i64, scratch_operands = 0 : i64, tpu.core_type = #tpu.core_type<tc>, window_params = [{pipeline_mode = #tpu.pipeline_mode<synchronous>, transform_indices = @transform_0, window_bounds = array<i64: 16, 36>}, {pipeline_mode = #tpu.pipeline_mode<synchronous>, transform_indices = @transform_1, window_bounds = array<i64: 16, 1>}, {transform_indices = @transform_2, window_bounds = array<i64: 36, 512>}, {transform_indices = @transform_3, window_bounds = array<i64: 16, 512>}]} {
    %c0 = arith.constant 0 : index
    %c0_0 = arith.constant 0 : index
    %0 = vector.load %arg1[%c0, %c0_0] : memref<16x36xf32, #tpu.memory_space<vmem>>, vector<16x36xf32>
    %c0_1 = arith.constant 0 : index
    %c0_2 = arith.constant 0 : index
    %1 = vector.load %arg3[%c0_1, %c0_2] : memref<36x512xf32, #tpu.memory_space<vmem>>, vector<36x512xf32>
    %cst = arith.constant dense<0.000000e+00> : vector<16x512xf32>
    %2 = tpu.matmul %0, %1, %cst {dimension_numbers = #tpu.dot_dimension_numbers<[1], [0], [0], [1], [0, 0, 1, 1], [], []>} : vector<16x36xf32>, vector<36x512xf32>, vector<16x512xf32> -> vector<16x512xf32>
    %c0_3 = arith.constant 0 : index
    %c0_4 = arith.constant 0 : index
    %3 = vector.load %arg2[%c0_3, %c0_4] : memref<16x1xf32, #tpu.memory_space<vmem>>, vector<16x1xf32>
    %4 = vector.broadcast %3 : vector<16x1xf32> to vector<16x512xf32>
    %5 = arith.addf %2, %4 : vector<16x512xf32>
    %c0_5 = arith.constant 0 : index
    %c0_6 = arith.constant 0 : index
    %6 = vector.load %arg4[%c0_5, %c0_6] : memref<16x512xf32, #tpu.memory_space<vmem>>, vector<16x512xf32>
    tpu.vector_store %arg4[%c0_5, %c0_6], %5 {strides = array<i32>} : memref<16x512xf32, #tpu.memory_space<vmem>>, vector<16x512xf32>,
    return
  }
  func.func @transform_0(%arg0: i32) -> (i32, i32) {
    %c0_i32 = arith.constant 0 : i32
    %c0_i32_0 = arith.constant 0 : i32
    %c0_i32_1 = arith.constant 0 : i32
    return %c0_i32, %c0_i32_0 : i32, i32
  }
  func.func @transform_1(%arg0: i32) -> (i32, i32) {
    %c0_i32 = arith.constant 0 : i32
    %c0_i32_0 = arith.constant 0 : i32
    %c0_i32_1 = arith.constant 0 : i32
    return %c0_i32, %c0_i32_0 : i32, i32
  }
  func.func @transform_2(%arg0: i32) -> (i32, i32) {
    %c0_i32 = arith.constant 0 : i32
    %c0_i32_0 = arith.constant 0 : i32
    return %c0_i32, %arg0 : i32, i32
  }
  func.func @transform_3(%arg0: i32) -> (i32, i32) {
    %c0_i32 = arith.constant 0 : i32
    %c0_i32_0 = arith.constant 0 : i32
    return %c0_i32, %arg0 : i32, i32
  }
}

</mosaic_0001>

<llo_original>
// kernel: tpu_custom_call.1
$region0: #{tpu_custom_call.1}
  #allocation0 [shape = 'u32[]', space=smem, size = 0x4, offset = 0x4, fixed_abs, tag = 'smem constant byte address 0x4 - core index']
  #allocation1 [shape = 'u32[144,128]{1,0:T(1,128)}', space=vmem, size = 0x12000, scoped, tag = 'internal scratch']
  %s0 = inlined_call_operand.vmem [shape: f32[16,36], index: 0, kind: input, shape index: {}]
  %s1 = inlined_call_operand.vmem [shape: f32[16,1], index: 1, kind: input, shape index: {}]
  %s2 = inlined_call_operand.hbm [shape: f32[36,512], index: 2, kind: input, shape index: {}]
  %s3 = inlined_call_operand.hbm [shape: f32[16,512], index: 3, kind: output, shape index: {}]
  %s4 = sld [smem:[#allocation0]]
  $region26: #{tpu_custom_call.1} parent=0
    _
  %s6 = ssub.s32 1, %s4
  %s7 = scalar_select 0, %s6, %s4
  $region1: #{tpu_custom_call.1} parent=0
    #allocation2 [shape = 'u8[81920]{0}', space=vmem, size = 0x14000, scoped, tag = 'input window, operand 2, single buffered']
    #allocation3 [shape = 's32[1]{0}', space=sflag, size = 0x4, scoped, tag = 'scoped memory for tpu_custom_call.1']
    #allocation4 [shape = 's32[1]{0}', space=sflag, size = 0x4, scoped, tag = 'scoped memory for tpu_custom_call.1']
    #allocation5 [shape = 'u8[32768]{0}', space=vmem, size = 0x8000, scoped, tag = 'output window, operand 0, single buffered']
    %8 = vsyncpa [#allocation3], 0
    %9 = vsyncpa [#allocation4], 0
    // Predicated region
    $region2: #{tpu_custom_call.1} parent=1 // pred_check
      _
    $region3: #{tpu_custom_call.1} parent=1 // pred_check_branch
      %11 = sbr.rel (0) target = $region5
    $region4: #{tpu_custom_call.1} parent=1 // pred_region
      _
    $region5: #{tpu_custom_call.1} parent=1 // pred_fallthru
      _
    // Predicated region
    $region6: #{tpu_custom_call.1} parent=1 // pred_check
      _
    $region7: #{tpu_custom_call.1} parent=1 // pred_check_branch
      %13 = sbr.rel (0) target = $region9
    $region8: #{tpu_custom_call.1} parent=1 // pred_region
      _
    $region9: #{tpu_custom_call.1} parent=1 // pred_fallthru
      _
    // Predicated region
    $region10: #{tpu_custom_call.1} parent=1 // pred_check
      _
    $region11: #{tpu_custom_call.1} parent=1 // pred_check_branch
      %15 = sbr.rel (0) target = $region13
    $region12: #{tpu_custom_call.1} parent=1 // pred_region
      %s17 = ssub.s32 2560, 2560
      %18 = vsyncadd [#allocation3], %s17
      %s19 = sshll.u32 [#allocation2], 4
      %s20 = int_to_ptr.vmem [resolvable:$true] %s19
      %25 = dma.hbm_to_vmem [thread:$0]  %s2, 2560, %s20, [#allocation3], 512, 512, 32
    $region13: #{tpu_custom_call.1} parent=1 // pred_fallthru
      _
    // Predicated region
    $region14: #{tpu_custom_call.1} parent=1 // pred_check
      _
    $region15: #{tpu_custom_call.1} parent=1 // pred_check_branch
      %27 = sbr.rel (0) target = $region17
    $region16: #{tpu_custom_call.1} parent=1 // pred_region
      %28 = dma.done [#allocation3], 2560
    $region17: #{tpu_custom_call.1} parent=1 // pred_fallthru
      _
    %v29 = vld [vmem:[%s0] sm:$0xff]
    %v30 = vld [vmem:[%s0 + $0x8] sm:$0xff]
    %v31 = vld [vmem:[#allocation2] sm:$0xff]
    %v32 = vld [vmem:[#allocation2 + $0x8] sm:$0xff]
    %v33 = vld [vmem:[#allocation2 + $0x10] sm:$0xff]
    %v34 = vld [vmem:[#allocation2 + $0x18] sm:$0xff]
    %v35 = vld [vmem:[#allocation2 + $0x20] sm:$0xff]
    %v36 = vld [vmem:[#allocation2 + $0x28] sm:$0xff]
    %v37 = vld [vmem:[#allocation2 + $0x30] sm:$0xff]
    %v38 = vld [vmem:[#allocation2 + $0x38] sm:$0xff]
    %v39 = vld [vmem:[#allocation2 + $0x40] sm:$0xff]
    %v40 = vld [vmem:[#allocation2 + $0x48] sm:$0xff]
    %v41 = vld [vmem:[#allocation2 + $0x50] sm:$0xff]
    %v42 = vld [vmem:[#allocation2 + $0x58] sm:$0xff]
    %v43 = vld [vmem:[#allocation2 + $0x60] sm:$0xff]
    %v44 = vld [vmem:[#allocation2 + $0x68] sm:$0xff]
    %v45 = vld [vmem:[#allocation2 + $0x70] sm:$0xff]
    %v46 = vld [vmem:[#allocation2 + $0x78] sm:$0xff]
    %v47 = vld [vmem:[#allocation2 + $0x80] sm:$0xf]
    %v48 = vld [vmem:[#allocation2 + $0x88] sm:$0xf]
    %v49 = vld [vmem:[#allocation2 + $0x90] sm:$0xf]
    %v50 = vld [vmem:[#allocation2 + $0x98] sm:$0xf]
    %v51 = vld [vmem:[%s1] sm:$0xff]
    %v52 = vld [vmem:[%s1 + $0x8] sm:$0xff]
    %54 = vset.pattern.permute.xlu0 0
    %55 = vperm.xlu0 %54, %v51
    %v56 = vpop.permute.xlu0 %55
    %59 = vset.pattern.permute.xlu0 0
    %60 = vperm.xlu0 %59, %v52
    %v61 = vpop.permute.xlu0 %60
    %vm63 = vcmask 293888
    %v65 = vsel %vm63, %v29, 0
    %v68 = vsel %vm63, %v30, 0
    %vm70 = vcmask 1043456
    %v72 = vsel %vm70, %v47, 0
    %v75 = vsel %vm70, %v48, 0
    %v78 = vsel %vm70, %v49, 0
    %v81 = vsel %vm70, %v50, 0
    %83 = vmatprep.subr.mxu0 %v32
    %84 = vmatpush1.msra.mxu0 %v31
    %85 = vmatprep.subr.mxu0 %v36
    %86 = vmatpush1.msra.mxu0 %v35
    %87 = vmatprep.subr.mxu0 %v40
    %88 = vmatpush1.msra.mxu0 %v39
    %89 = vmatprep.subr.mxu0 %v44
    %90 = vmatpush1.msra.mxu0 %v43
    %91 = vmatprep.subr.mxu0 %v75
    %92 = vmatpush1.msra.mxu0 %v72
    %93 = vmatprep.subr.mxu0 0.0
    %94 = vmatpush1.msra.mxu0 0.0
    %95 = vmatprep.subr.mxu0 0.0
    %96 = vmatpush1.msra.mxu0 0.0
    %97 = vmatprep.subr.mxu0 0.0
    %98 = vmatpush1.msra.mxu0 0.0
    %99 = vmatprep.subr.mxu0 0.0
    %100 = vmatpush1.msra.mxu0 0.0
    %101 = vmatprep.subr.mxu0 0.0
    %102 = vmatpush1.msra.mxu0 0.0
    %103 = vmatprep.subr.mxu0 0.0
    %104 = vmatpush1.msra.mxu0 0.0
    %105 = vmatprep.subr.mxu0 0.0
    %106 = vmatpush1.msra.mxu0 0.0
    %107 = vmatprep.subr.mxu0 0.0
    %108 = vmatpush1.msra.mxu0 0.0
    %109 = vmatprep.subr.mxu0 0.0
    %110 = vmatpush1.msra.mxu0 0.0
    %111 = vmatprep.subr.mxu0 0.0
    %112 = vmatpush1.msra.mxu0 0.0
    %113 = vmatprep.subr.mxu0 0.0
    %114 = vmatpush1.msra.mxu0 0.0
    %115 = vmatprep.subr.mxu0 0.0
    %116 = vmatpush1.msra.mxu0 0.0
    %117 = vmatprep.subr.mxu0 0.0
    %118 = vmatpush1.msra.mxu0 0.0
    %119 = vmatprep.subr.mxu0 0.0
    %120 = vmatpush1.msra.mxu0 0.0
    %121 = vmatprep.subr.mxu0 0.0
    %122 = vmatpush1.msra.mxu0 0.0
    %123 = vmatprep.subr.mxu0 0.0
    %124 = vmatpush1.msra.mxu0 0.0
    %125 = vmatprep.subr.mxu0 0.0
    %126 = vmatpush1.msra.mxu0 0.0
    %127 = vmatprep.subr.mxu0 0.0
    %128 = vmatpush1.msra.mxu0 0.0
    %129 = vmatprep.subr.mxu0 0.0
    %130 = vmatpush1.msra.mxu0 0.0
    %131 = vmatprep.subr.mxu0 0.0
    %132 = vmatpush1.msra.mxu0 0.0
    %133 = vmatprep.subr.mxu0 0.0
    %134 = vmatpush1.msra.mxu0 0.0
    %135 = vmatprep.subr.mxu0 0.0
    %136 = vmatpush1.msra.mxu0 0.0
    %137 = vmatprep.subr.mxu0 0.0
    %138 = vmatpush1.msra.mxu0 0.0
    %139 = vmatprep.subr.mxu0 0.0
    %140 = vmatpush1.msra.mxu0 0.0
    %141 = vmatprep.subr.mxu0 0.0
    %142 = vmatpush1.msra.mxu0 0.0
    %143 = vmatprep.subr.mxu0 0.0
    %144 = vmatpush1.msra.mxu0 0.0
    %145 = vmatprep.subr.mxu0 0.0
    %146 = vmatpush1.msra.mxu0 0.0
    %147 = vmatprep.mubr.f32.mxu0 0.0
    %148 = vmatmul.mubr.f32.gmra.mrb[0].mxu0 %v65
    %v149 = vpop.f32.mrb[0].mxu0
    %v150 = vadd.f32 %v56, %v149
    %v151 = vpop.f32.mrb[0].mxu0
    %v152 = vadd.f32 %v56, %v151
    %153 = vmatprep.mubr.f32.mxu0 0.0
    %154 = vmatmul.mubr.f32.gmra.mrb[0].mxu0 %v68
    %v155 = vpop.f32.mrb[0].mxu0
    %v156 = vadd.f32 %v61, %v155
    %v157 = vpop.f32.mrb[0].mxu0
    %v158 = vadd.f32 %v61, %v157
    %159 = vdwg.mxu0
    %160 = vmatprep.subr.mxu0 %v34
    %161 = vmatpush1.msra.mxu0 %v33
    %162 = vmatprep.subr.mxu0 %v38
    %163 = vmatpush1.msra.mxu0 %v37
    %164 = vmatprep.subr.mxu0 %v42
    %165 = vmatpush1.msra.mxu0 %v41
    %166 = vmatprep.subr.mxu0 %v46
    %167 = vmatpush1.msra.mxu0 %v45
    %168 = vmatprep.subr.mxu0 %v81
    %169 = vmatpush1.msra.mxu0 %v78
    %170 = vmatprep.subr.mxu0 0.0
    %171 = vmatpush1.msra.mxu0 0.0
    %172 = vmatprep.subr.mxu0 0.0
    %173 = vmatpush1.msra.mxu0 0.0
    %174 = vmatprep.subr.mxu0 0.0
    %175 = vmatpush1.msra.mxu0 0.0
    %176 = vmatprep.subr.mxu0 0.0
    %177 = vmatpush1.msra.mxu0 0.0
    %178 = vmatprep.subr.mxu0 0.0
    %179 = vmatpush1.msra.mxu0 0.0
    %180 = vmatprep.subr.mxu0 0.0
    %181 = vmatpush1.msra.mxu0 0.0
    %182 = vmatprep.subr.mxu0 0.0
    %183 = vmatpush1.msra.mxu0 0.0
    %184 = vmatprep.subr.mxu0 0.0
    %185 = vmatpush1.msra.mxu0 0.0
    %186 = vmatprep.subr.mxu0 0.0
    %187 = vmatpush1.msra.mxu0 0.0
    %188 = vmatprep.subr.mxu0 0.0
    %189 = vmatpush1.msra.mxu0 0.0
    %190 = vmatprep.subr.mxu0 0.0
    %191 = vmatpush1.msra.mxu0 0.0
    %192 = vmatprep.subr.mxu0 0.0
    %193 = vmatpush1.msra.mxu0 0.0
    %194 = vmatprep.subr.mxu0 0.0
    %195 = vmatpush1.msra.mxu0 0.0
    %196 = vmatprep.subr.mxu0 0.0
    %197 = vmatpush1.msra.mxu0 0.0
    %198 = vmatprep.subr.mxu0 0.0
    %199 = vmatpush1.msra.mxu0 0.0
    %200 = vmatprep.subr.mxu0 0.0
    %201 = vmatpush1.msra.mxu0 0.0
    %202 = vmatprep.subr.mxu0 0.0
    %203 = vmatpush1.msra.mxu0 0.0
    %204 = vmatprep.subr.mxu0 0.0
    %205 = vmatpush1.msra.mxu0 0.0
    %206 = vmatprep.subr.mxu0 0.0
    %207 = vmatpush1.msra.mxu0 0.0
    %208 = vmatprep.subr.mxu0 0.0
    %209 = vmatpush1.msra.mxu0 0.0
    %210 = vmatprep.subr.mxu0 0.0
    %211 = vmatpush1.msra.mxu0 0.0
    %212 = vmatprep.subr.mxu0 0.0
    %213 = vmatpush1.msra.mxu0 0.0
    %214 = vmatprep.subr.mxu0 0.0
    %215 = vmatpush1.msra.mxu0 0.0
    %216 = vmatprep.subr.mxu0 0.0
    %217 = vmatpush1.msra.mxu0 0.0
    %218 = vmatprep.subr.mxu0 0.0
    %219 = vmatpush1.msra.mxu0 0.0
    %220 = vmatprep.subr.mxu0 0.0
    %221 = vmatpush1.msra.mxu0 0.0
    %222 = vmatprep.subr.mxu0 0.0
    %223 = vmatpush1.msra.mxu0 0.0
    %224 = vmatprep.mubr.f32.mxu0 0.0
    %225 = vmatmul.mubr.f32.gmra.mrb[0].mxu0 %v65
    %v226 = vpop.f32.mrb[0].mxu0
    %v227 = vadd.f32 %v56, %v226
    %v228 = vpop.f32.mrb[0].mxu0
    %v229 = vadd.f32 %v56, %v228
    %230 = vmatprep.mubr.f32.mxu0 0.0
    %231 = vmatmul.mubr.f32.gmra.mrb[0].mxu0 %v68
    %v232 = vpop.f32.mrb[0].mxu0
    %v233 = vadd.f32 %v61, %v232
    %v234 = vpop.f32.mrb[0].mxu0
    %v235 = vadd.f32 %v61, %v234
    %236 = vdwg.mxu0
    %237 = vst [vmem:[#allocation5] sm:$0xff] %v150
    %238 = vst [vmem:[#allocation5 + $0x8] sm:$0xff] %v152
    %239 = vst [vmem:[#allocation5 + $0x10] sm:$0xff] %v227
    %240 = vst [vmem:[#allocation5 + $0x18] sm:$0xff] %v229
    %241 = vst [vmem:[#allocation5 + $0x20] sm:$0xff] %v156
    %242 = vst [vmem:[#allocation5 + $0x28] sm:$0xff] %v158
    %243 = vst [vmem:[#allocation5 + $0x30] sm:$0xff] %v233
    %244 = vst [vmem:[#allocation5 + $0x38] sm:$0xff] %v235
    // Predicated region
    $region18: #{tpu_custom_call.1} parent=1 // pred_check
      _
    $region19: #{tpu_custom_call.1} parent=1 // pred_check_branch
      %246 = sbr.rel (0) target = $region21
    $region20: #{tpu_custom_call.1} parent=1 // pred_region
      %s248 = ssub.s32 1024, 1024
      %249 = vsyncadd [#allocation4], %s248
      %s250 = sshll.u32 [#allocation5], 4
      %s251 = int_to_ptr.vmem [resolvable:$true] %s250
      %256 = dma.vmem_to_hbm [thread:$0]  %s251, 1024, %s3, [#allocation4], 512, 512, 32
    $region21: #{tpu_custom_call.1} parent=1 // pred_fallthru
      _
    // Predicated region
    $region22: #{tpu_custom_call.1} parent=1 // pred_check
      _
    $region23: #{tpu_custom_call.1} parent=1 // pred_check_branch
      %258 = sbr.rel (0) target = $region25
    $region24: #{tpu_custom_call.1} parent=1 // pred_region
      %259 = dma.done [#allocation4], 1024
    $region25: #{tpu_custom_call.1} parent=1 // pred_fallthru
      _
    %260 = vsyncpa [#allocation3], 1
    %261 = vsyncpa [#allocation4], 1

</llo_original>
